<compile_context>
chip_gen: v5e
topology: v5e:2x2
jax: 0.10.0
libtpu: 0.0.40
codegen_flags: <defaults>
</compile_context>

<pallas_src>
import functools

import jax
import jax.numpy as jnp
from jax.experimental import pallas as pl
from jax.experimental.pallas import tpu as pltpu


def _round_up(x, m):
    return ((x + m - 1) // m) * m


def _glove_loss_kernel(batch_size,
                       viT_ref, wjT_ref,   # VMEM (E, TB): gathered rows, transposed
                       aux_ref,            # VMEM (8, TB): [log(co), wt, bi, bj, 0...]
                       out_ref,            # VMEM (1, 1) f32 output
                       acc_ref):           # VMEM (8, TB) f32 lane-dense partial sums
    step = pl.program_id(0)

    @pl.when(step == 0)
    def _init():
        acc_ref[...] = jnp.zeros_like(acc_ref)

    # sim[b] = sum_e v[i[b], e] * w[j[b], e]   (batch along lanes)
    prod = viT_ref[...] * wjT_ref[...]                   # (E, TB)  VPU
    sim = jnp.sum(prod, axis=0, keepdims=True)           # (1, TB)  sublane reduce

    logco = aux_ref[0:1, :]                              # (1, TB)
    wt    = aux_ref[1:2, :]
    bi    = aux_ref[2:3, :]
    bj    = aux_ref[3:4, :]

    s = sim - logco                                      # s[b] = sim[b] - log(co[b])
    c = bi + bj                                          # c[b] = bi[b] + bj[b]
    ws = wt * s

    # Lane-dense per-lane partial sums; padded rows carry wt = 0, bi = bj = 0,
    # so they contribute exactly zero to every accumulator.
    acc_ref[0:1, :] += ws * s                            # sum wt * s^2
    acc_ref[1:2, :] += ws                                # sum wt * s
    acc_ref[2:3, :] += wt                                # sum wt
    acc_ref[3:4, :] += c                                 # sum c
    acc_ref[4:5, :] += c * c                             # sum c^2

    @pl.when(step == pl.num_programs(0) - 1)
    def _finalize():
        def red(q):
            return jnp.sum(acc_ref[q:q + 1, :], axis=1, keepdims=True)  # (1, 1)
        s_ws2, s_ws, s_w, s_c, s_c2 = red(0), red(1), red(2), red(3), red(4)
        out_ref[...] = 0.5 * (batch_size * s_ws2
                              + 2.0 * s_c * s_ws
                              + s_c2 * s_w)


def glove_forward(params, i, j, co_occur, weight, tb_max=512):
    """Pallas-backed equivalent of GloveModelForBGD.forward."""
    v, w = params["v"], params["w"]
    biasv, biasw = params["biasv"], params["biasw"]
    B = int(i.shape[0])
    E = int(v.shape[1])

    i32 = i.astype(jnp.int32)
    j32 = j.astype(jnp.int32)

    # Dense wrapper-side gathers (one XLA gather each) replacing the per-row
    # Element(1) micro-DMAs of the previous version.  Biases are flattened to
    # 1-D before gathering (review item 3).
    vi = jnp.take(v, i32, axis=0).astype(jnp.float32)          # (B, E)
    wj = jnp.take(w, j32, axis=0).astype(jnp.float32)          # (B, E)
    bi = jnp.take(biasv[:, 0], i32, axis=0).astype(jnp.float32)  # (B,)
    bj = jnp.take(biasw[:, 0], j32, axis=0).astype(jnp.float32)  # (B,)
    logco = jnp.log(co_occur).astype(jnp.float32)              # fold log host-side
    wt = weight.astype(jnp.float32)

    # Block size: lane-aligned (multiple of 128), capped at tb_max.
    TB = min(tb_max, _round_up(B, 128))
    Bp = _round_up(B, TB)
    pad = Bp - B

    vi = jnp.pad(vi, ((0, pad), (0, 0)))
    wj = jnp.pad(wj, ((0, pad), (0, 0)))

    def pad1(x):
        return jnp.pad(x, (0, pad))

    zeros = jnp.zeros((Bp,), jnp.float32)
    aux = jnp.stack([pad1(logco), pad1(wt), pad1(bi), pad1(bj),
                     zeros, zeros, zeros, zeros])               # (8, Bp)

    # Transposed (E, Bp) layout: batch along the 128-lane axis so every
    # per-row quantity in the kernel is lane-dense.
    viT = vi.T                                                  # (E, Bp)
    wjT = wj.T                                                  # (E, Bp)

    kernel = functools.partial(_glove_loss_kernel, float(B))

    grid_spec = pltpu.PrefetchScalarGridSpec(
        num_scalar_prefetch=0,
        grid=(Bp // TB,),                                       # reduction over row blocks
        in_specs=[
            pl.BlockSpec((E, TB), lambda b: (0, b)),            # v rows (transposed)
            pl.BlockSpec((E, TB), lambda b: (0, b)),            # w rows (transposed)
            pl.BlockSpec((8, TB), lambda b: (0, b)),            # aux slab
        ],
        out_specs=pl.BlockSpec((1, 1), lambda b: (0, 0)),
        scratch_shapes=[pltpu.VMEM((8, TB), jnp.float32)],      # lane-dense partials
    )

    out = pl.pallas_call(
        kernel,
        out_shape=jax.ShapeDtypeStruct((1, 1), jnp.float32),
        grid_spec=grid_spec,
        compiler_params=pltpu.CompilerParams(
            dimension_semantics=("arbitrary",)),                # sequential reduction
    )(viT, wjT, aux)
    return out[0, 0]


def ref_forward(params, i, j, co_occur, weight):
    """Plain-JAX reference mirroring the PyTorch forward (incl. (B,B) broadcast)."""
    vi = params["v"][i]
    wj = params["w"][j]
    bi = params["biasv"][i]                          # (B, 1)
    bj = params["biasw"][j]                          # (B, 1)
    sim = jnp.sum(vi * wj, axis=1)                   # (B,)
    loss = sim + bi + bj - jnp.log(co_occur)         # broadcasts to (B, B)
    loss = 0.5 * weight * loss * loss
    return loss.sum()                                # .mean() of a scalar == scalar


def init_params(key, vocab_size, embed_size):
    initrange = 0.5 / embed_size
    k1, k2, k3, k4 = jax.random.split(key, 4)
    return {
        # nn.Embedding weights, uniform(-initrange, initrange) as in __init__
        "v": jax.random.uniform(k1, (vocab_size, embed_size), jnp.float32,
                                -initrange, initrange),
        "w": jax.random.uniform(k2, (vocab_size, embed_size), jnp.float32,
                                -initrange, initrange),
        # bias embeddings keep nn.Embedding's default N(0, 1) init
        "biasv": jax.random.normal(k3, (vocab_size, 1), jnp.float32),
        "biasw": jax.random.normal(k4, (vocab_size, 1), jnp.float32),
    }


if __name__ == "__main__":
    vocab_size = 50
    embed_size = 32
    batch = 8

    key = jax.random.PRNGKey(0)
    kp, ki, kj, kc, kw = jax.random.split(key, 5)

    params = init_params(kp, vocab_size, embed_size)
    i = jax.random.randint(ki, (batch,), 0, vocab_size, dtype=jnp.int32)
    j = jax.random.randint(kj, (batch,), 0, vocab_size, dtype=jnp.int32)
    co_occur = jax.random.uniform(kc, (batch,), jnp.float32, 1.0, 10.0)
    weight = jax.random.uniform(kw, (batch,), jnp.float32, 0.1, 1.0)

    out = glove_forward(params, i, j, co_occur, weight)
    out = jax.block_until_ready(out)

    ref = ref_forward(params, i, j, co_occur, weight)
    # Summation order differs from the explicit (B,B) reference (factored form),
    # so compare with float32-appropriate tolerances rather than exact equality.
    assert jnp.allclose(out, ref, rtol=1e-4, atol=1e-4), (out, ref)

    print("KERNEL_OK")
</pallas_src>

<mosaic_0001>
module attributes {stable_mosaic.version = 11 : i64} {
  func.func @_glove_loss_kernel(%arg0: i32, %arg1: memref<32x128xf32, #tpu.memory_space<vmem>>, %arg2: memref<32x128xf32, #tpu.memory_space<vmem>>, %arg3: memref<8x128xf32, #tpu.memory_space<vmem>>, %arg4: memref<1x1xf32, #tpu.memory_space<vmem>>, %arg5: memref<8x128xf32, #tpu.memory_space<vmem>>) attributes {dimension_semantics = [#tpu.dimension_semantics<arbitrary>], iteration_bounds = array<i64: 1>, scalar_prefetch = 0 : i64, scratch_operands = 1 : i64, tpu.core_type = #tpu.core_type<tc>, window_params = [{transform_indices = @transform_0, window_bounds = array<i64: 32, 128>}, {transform_indices = @transform_1, window_bounds = array<i64: 32, 128>}, {transform_indices = @transform_2, window_bounds = array<i64: 8, 128>}, {pipeline_mode = #tpu.pipeline_mode<synchronous>, transform_indices = @transform_3, window_bounds = array<i64: 1, 1>}]} {
    %c0_i32 = arith.constant 0 : i32
    %0 = arith.cmpi eq, %arg0, %c0_i32 : i32
    %1 = arith.extui %0 : i1 to i32
    %c0_i32_0 = arith.constant 0 : i32
    %2 = arith.cmpi ne, %1, %c0_i32_0 : i32
    scf.if %2 {
      %cst_30 = arith.constant 0.000000e+00 : f32
      %35 = vector.broadcast %cst_30 : f32 to vector<8x128xf32>
      %c0_31 = arith.constant 0 : index
      %c0_32 = arith.constant 0 : index
      %36 = vector.load %arg5[%c0_31, %c0_32] : memref<8x128xf32, #tpu.memory_space<vmem>>, vector<8x128xf32>
      tpu.vector_store %arg5[%c0_31, %c0_32], %35 {strides = array<i32>} : memref<8x128xf32, #tpu.memory_space<vmem>>, vector<8x128xf32>,
    } else {
    }
    %c0 = arith.constant 0 : index
    %c0_1 = arith.constant 0 : index
    %3 = vector.load %arg1[%c0, %c0_1] : memref<32x128xf32, #tpu.memory_space<vmem>>, vector<32x128xf32>
    %c0_2 = arith.constant 0 : index
    %c0_3 = arith.constant 0 : index
    %4 = vector.load %arg2[%c0_2, %c0_3] : memref<32x128xf32, #tpu.memory_space<vmem>>, vector<32x128xf32>
    %5 = arith.mulf %3, %4 : vector<32x128xf32>
    %cst = arith.constant dense<0.000000e+00> : vector<128xf32>
    %6 = vector.multi_reduction <add>, %5, %cst [0] : vector<32x128xf32> to vector<128xf32>
    %7 = vector.shape_cast %6 : vector<128xf32> to vector<1x128xf32>
    %c0_4 = arith.constant 0 : index
    %c0_5 = arith.constant 0 : index
    %8 = vector.load %arg3[%c0_4, %c0_5] : memref<8x128xf32, #tpu.memory_space<vmem>>, vector<1x128xf32>
    %c1 = arith.constant 1 : index
    %c0_6 = arith.constant 0 : index
    %9 = vector.load %arg3[%c1, %c0_6] : memref<8x128xf32, #tpu.memory_space<vmem>>, vector<1x128xf32>
    %c2 = arith.constant 2 : index
    %c0_7 = arith.constant 0 : index
    %10 = vector.load %arg3[%c2, %c0_7] : memref<8x128xf32, #tpu.memory_space<vmem>>, vector<1x128xf32>
    %c3 = arith.constant 3 : index
    %c0_8 = arith.constant 0 : index
    %11 = vector.load %arg3[%c3, %c0_8] : memref<8x128xf32, #tpu.memory_space<vmem>>, vector<1x128xf32>
    %12 = arith.subf %7, %8 : vector<1x128xf32>
    %13 = arith.addf %10, %11 : vector<1x128xf32>
    %14 = arith.mulf %9, %12 : vector<1x128xf32>
    %c0_9 = arith.constant 0 : index
    %c0_10 = arith.constant 0 : index
    %15 = vector.load %arg5[%c0_9, %c0_10] : memref<8x128xf32, #tpu.memory_space<vmem>>, vector<1x128xf32>
    %16 = arith.mulf %14, %12 : vector<1x128xf32>
    %17 = arith.addf %15, %16 : vector<1x128xf32>
    %c0_11 = arith.constant 0 : index
    %c0_12 = arith.constant 0 : index
    %18 = vector.load %arg5[%c0_11, %c0_12] : memref<8x128xf32, #tpu.memory_space<vmem>>, vector<1x128xf32>
    tpu.vector_store %arg5[%c0_11, %c0_12], %17 {strides = array<i32>} : memref<8x128xf32, #tpu.memory_space<vmem>>, vector<1x128xf32>,
    %c1_13 = arith.constant 1 : index
    %c0_14 = arith.constant 0 : index
    %19 = vector.load %arg5[%c1_13, %c0_14] : memref<8x128xf32, #tpu.memory_space<vmem>>, vector<1x128xf32>
    %20 = arith.addf %19, %14 : vector<1x128xf32>
    %c1_15 = arith.constant 1 : index
    %c0_16 = arith.constant 0 : index
    %21 = vector.load %arg5[%c1_15, %c0_16] : memref<8x128xf32, #tpu.memory_space<vmem>>, vector<1x128xf32>
    tpu.vector_store %arg5[%c1_15, %c0_16], %20 {strides = array<i32>} : memref<8x128xf32, #tpu.memory_space<vmem>>, vector<1x128xf32>,
    %c2_17 = arith.constant 2 : index
    %c0_18 = arith.constant 0 : index
    %22 = vector.load %arg5[%c2_17, %c0_18] : memref<8x128xf32, #tpu.memory_space<vmem>>, vector<1x128xf32>
    %23 = arith.addf %22, %9 : vector<1x128xf32>
    %c2_19 = arith.constant 2 : index
    %c0_20 = arith.constant 0 : index
    %24 = vector.load %arg5[%c2_19, %c0_20] : memref<8x128xf32, #tpu.memory_space<vmem>>, vector<1x128xf32>
    tpu.vector_store %arg5[%c2_19, %c0_20], %23 {strides = array<i32>} : memref<8x128xf32, #tpu.memory_space<vmem>>, vector<1x128xf32>,
    %c3_21 = arith.constant 3 : index
    %c0_22 = arith.constant 0 : index
    %25 = vector.load %arg5[%c3_21, %c0_22] : memref<8x128xf32, #tpu.memory_space<vmem>>, vector<1x128xf32>
    %26 = arith.addf %25, %13 : vector<1x128xf32>
    %c3_23 = arith.constant 3 : index
    %c0_24 = arith.constant 0 : index
    %27 = vector.load %arg5[%c3_23, %c0_24] : memref<8x128xf32, #tpu.memory_space<vmem>>, vector<1x128xf32>
    tpu.vector_store %arg5[%c3_23, %c0_24], %26 {strides = array<i32>} : memref<8x128xf32, #tpu.memory_space<vmem>>, vector<1x128xf32>,
    %c4 = arith.constant 4 : index
    %c0_25 = arith.constant 0 : index
    %28 = vector.load %arg5[%c4, %c0_25] : memref<8x128xf32, #tpu.memory_space<vmem>>, vector<1x128xf32>
    %29 = arith.mulf %13, %13 : vector<1x128xf32>
    %30 = arith.addf %28, %29 : vector<1x128xf32>
    %c4_26 = arith.constant 4 : index
    %c0_27 = arith.constant 0 : index
    %31 = vector.load %arg5[%c4_26, %c0_27] : memref<8x128xf32, #tpu.memory_space<vmem>>, vector<1x128xf32>
    tpu.vector_store %arg5[%c4_26, %c0_27], %30 {strides = array<i32>} : memref<8x128xf32, #tpu.memory_space<vmem>>, vector<1x128xf32>,
    %c0_i32_28 = arith.constant 0 : i32
    %32 = arith.cmpi eq, %arg0, %c0_i32_28 : i32
    %33 = arith.extui %32 : i1 to i32
    %c0_i32_29 = arith.constant 0 : i32
    %34 = arith.cmpi ne, %33, %c0_i32_29 : i32
    scf.if %34 {
      %c0_30 = arith.constant 0 : index
      %c0_31 = arith.constant 0 : index
      %35 = vector.load %arg5[%c0_30, %c0_31] : memref<8x128xf32, #tpu.memory_space<vmem>>, vector<1x128xf32>
      %cst_32 = arith.constant dense<0.000000e+00> : vector<1xf32>
      %36 = vector.multi_reduction <add>, %35, %cst_32 [1] : vector<1x128xf32> to vector<1xf32>
      %37 = vector.shape_cast %36 : vector<1xf32> to vector<1x1xf32>
      %c1_33 = arith.constant 1 : index
      %c0_34 = arith.constant 0 : index
      %38 = vector.load %arg5[%c1_33, %c0_34] : memref<8x128xf32, #tpu.memory_space<vmem>>, vector<1x128xf32>
      %cst_35 = arith.constant dense<0.000000e+00> : vector<1xf32>
      %39 = vector.multi_reduction <add>, %38, %cst_35 [1] : vector<1x128xf32> to vector<1xf32>
      %40 = vector.shape_cast %39 : vector<1xf32> to vector<1x1xf32>
      %c2_36 = arith.constant 2 : index
      %c0_37 = arith.constant 0 : index
      %41 = vector.load %arg5[%c2_36, %c0_37] : memref<8x128xf32, #tpu.memory_space<vmem>>, vector<1x128xf32>
      %cst_38 = arith.constant dense<0.000000e+00> : vector<1xf32>
      %42 = vector.multi_reduction <add>, %41, %cst_38 [1] : vector<1x128xf32> to vector<1xf32>
      %43 = vector.shape_cast %42 : vector<1xf32> to vector<1x1xf32>
      %c3_39 = arith.constant 3 : index
      %c0_40 = arith.constant 0 : index
      %44 = vector.load %arg5[%c3_39, %c0_40] : memref<8x128xf32, #tpu.memory_space<vmem>>, vector<1x128xf32>
      %cst_41 = arith.constant dense<0.000000e+00> : vector<1xf32>
      %45 = vector.multi_reduction <add>, %44, %cst_41 [1] : vector<1x128xf32> to vector<1xf32>
      %46 = vector.shape_cast %45 : vector<1xf32> to vector<1x1xf32>
      %c4_42 = arith.constant 4 : index
      %c0_43 = arith.constant 0 : index
      %47 = vector.load %arg5[%c4_42, %c0_43] : memref<8x128xf32, #tpu.memory_space<vmem>>, vector<1x128xf32>
      %cst_44 = arith.constant dense<0.000000e+00> : vector<1xf32>
      %48 = vector.multi_reduction <add>, %47, %cst_44 [1] : vector<1x128xf32> to vector<1xf32>
      %49 = vector.shape_cast %48 : vector<1xf32> to vector<1x1xf32>
      %cst_45 = arith.constant 8.000000e+00 : f32
      %50 = vector.broadcast %cst_45 : f32 to vector<1x1xf32>
      %51 = arith.mulf %50, %37 : vector<1x1xf32>
      %cst_46 = arith.constant 2.000000e+00 : f32
      %52 = vector.broadcast %cst_46 : f32 to vector<1x1xf32>
      %53 = arith.mulf %52, %46 : vector<1x1xf32>
      %54 = arith.mulf %53, %40 : vector<1x1xf32>
      %55 = arith.addf %51, %54 : vector<1x1xf32>
      %56 = arith.mulf %49, %43 : vector<1x1xf32>
      %57 = arith.addf %55, %56 : vector<1x1xf32>
      %cst_47 = arith.constant 5.000000e-01 : f32
      %58 = vector.broadcast %cst_47 : f32 to vector<1x1xf32>
      %59 = arith.mulf %58, %57 : vector<1x1xf32>
      %c0_48 = arith.constant 0 : index
      %c0_49 = arith.constant 0 : index
      %60 = vector.load %arg4[%c0_48, %c0_49] : memref<1x1xf32, #tpu.memory_space<vmem>>, vector<1x1xf32>
      tpu.vector_store %arg4[%c0_48, %c0_49], %59 {strides = array<i32>} : memref<1x1xf32, #tpu.memory_space<vmem>>, vector<1x1xf32>,
    } else {
    }
    return
  }
  func.func @transform_0(%arg0: i32) -> (i32, i32) {
    %c0_i32 = arith.constant 0 : i32
    %c0_i32_0 = arith.constant 0 : i32
    return %c0_i32, %arg0 : i32, i32
  }
  func.func @transform_1(%arg0: i32) -> (i32, i32) {
    %c0_i32 = arith.constant 0 : i32
    %c0_i32_0 = arith.constant 0 : i32
    return %c0_i32, %arg0 : i32, i32
  }
  func.func @transform_2(%arg0: i32) -> (i32, i32) {
    %c0_i32 = arith.constant 0 : i32
    %c0_i32_0 = arith.constant 0 : i32
    return %c0_i32, %arg0 : i32, i32
  }
  func.func @transform_3(%arg0: i32) -> (i32, i32) {
    %c0_i32 = arith.constant 0 : i32
    %c0_i32_0 = arith.constant 0 : i32
    %c0_i32_1 = arith.constant 0 : i32
    return %c0_i32, %c0_i32_0 : i32, i32
  }
}

</mosaic_0001>

<llo_original>
// kernel: tpu_custom_call.1
$region0: #{tpu_custom_call.1}
  #allocation0 [shape = 'u32[]', space=smem, size = 0x4, offset = 0x4, fixed_abs, tag = 'smem constant byte address 0x4 - core index']
  #allocation1 [shape = 'u32[72,128]{1,0:T(1,128)}', space=vmem, size = 0x9000, scoped, tag = 'internal scratch']
  #allocation2 [shape = 'f32[8,128]{1,0:T(8,128)}', space=vmem, size = 0x1000, scoped, tag = 'scratch operand']
  %s0 = inlined_call_operand.hbm [shape: f32[32,128], index: 0, kind: input, shape index: {}]
  %s1 = inlined_call_operand.hbm [shape: f32[32,128], index: 1, kind: input, shape index: {}]
  %s2 = inlined_call_operand.hbm [shape: f32[8,128], index: 2, kind: input, shape index: {}]
  %s3 = inlined_call_operand.hbm [shape: f32[1,1], index: 3, kind: output, shape index: {}]
  %s4 = sld [smem:[#allocation0]]
  $region42: #{tpu_custom_call.1} parent=0
    _
  %s6 = ssub.s32 1, %s4
  %s7 = scalar_select 0, %s6, %s4
  $region1: #{tpu_custom_call.1} parent=0
    #allocation3 [shape = 'u8[16384]{0}', space=vmem, size = 0x4000, scoped, tag = 'input window, operand 0, single buffered']
    #allocation4 [shape = 's32[1]{0}', space=sflag, size = 0x4, scoped, tag = 'scoped memory for tpu_custom_call.1']
    #allocation5 [shape = 's32[1]{0}', space=sflag, size = 0x4, scoped, tag = 'scoped memory for tpu_custom_call.1']
    #allocation6 [shape = 'u8[16384]{0}', space=vmem, size = 0x4000, scoped, tag = 'input window, operand 1, single buffered']
    #allocation7 [shape = 's32[1]{0}', space=sflag, size = 0x4, scoped, tag = 'scoped memory for tpu_custom_call.1']
    #allocation8 [shape = 'u8[4096]{0}', space=vmem, size = 0x1000, scoped, tag = 'input window, operand 2, single buffered']
    #allocation9 [shape = 'u8[512]{0}', space=vmem, size = 0x400, scoped, tag = 'output window, operand 0, single buffered']
    %8 = vsyncpa [#allocation4], 0
    %9 = vsyncpa [#allocation7], 0
    %10 = vsyncpa [#allocation5], 0
    // Predicated region
    $region2: #{tpu_custom_call.1} parent=1 // pred_check
      _
    $region3: #{tpu_custom_call.1} parent=1 // pred_check_branch
      %12 = sbr.rel (0) target = $region5
    $region4: #{tpu_custom_call.1} parent=1 // pred_region
      %14 = vsyncadd [#allocation4], 0
      %s15 = sshll.u32 %s0, 4
      %s16 = int_to_ptr.hbm [resolvable:$true] %s15
      %s17 = sshll.u32 [#allocation3], 4
      %s18 = int_to_ptr.vmem [resolvable:$true] %s17
      %23 = dma.hbm_to_vmem [thread:$0]  %s16, 512, %s18, [#allocation4], 128, 128, 8
    $region5: #{tpu_custom_call.1} parent=1 // pred_fallthru
      _
    // Predicated region
    $region6: #{tpu_custom_call.1} parent=1 // pred_check
      _
    $region7: #{tpu_custom_call.1} parent=1 // pred_check_branch
      %25 = sbr.rel (0) target = $region9
    $region8: #{tpu_custom_call.1} parent=1 // pred_region
      %27 = vsyncadd [#allocation7], 0
      %s28 = sshll.u32 %s1, 4
      %s29 = int_to_ptr.hbm [resolvable:$true] %s28
      %s30 = sshll.u32 [#allocation6], 4
      %s31 = int_to_ptr.vmem [resolvable:$true] %s30
      %36 = dma.hbm_to_vmem [thread:$0]  %s29, 512, %s31, [#allocation7], 128, 128, 8
    $region9: #{tpu_custom_call.1} parent=1 // pred_fallthru
      _
    // Predicated region
    $region10: #{tpu_custom_call.1} parent=1 // pred_check
      _
    $region11: #{tpu_custom_call.1} parent=1 // pred_check_branch
      %38 = sbr.rel (0) target = $region13
    $region12: #{tpu_custom_call.1} parent=1 // pred_region
      %40 = vsyncadd [#allocation7], 0
      %s42 = sshll.u32 %s2, 4
      %s43 = int_to_ptr.hbm [resolvable:$true] %s42
      %s44 = sshll.u32 [#allocation8], 4
      %s45 = int_to_ptr.vmem [resolvable:$true] %s44
      %47 = dma.hbm_to_vmem [thread:$0]  %s43, 128, %s45, [#allocation7]
    $region13: #{tpu_custom_call.1} parent=1 // pred_fallthru
      _
    // Predicated region
    $region14: #{tpu_custom_call.1} parent=1 // pred_check
      _
    $region15: #{tpu_custom_call.1} parent=1 // pred_check_branch
      %49 = sbr.rel (0) target = $region17
    $region16: #{tpu_custom_call.1} parent=1 // pred_region
      %51 = dma.done [#allocation4], 512
    $region17: #{tpu_custom_call.1} parent=1 // pred_fallthru
      _
    // Predicated region
    $region18: #{tpu_custom_call.1} parent=1 // pred_check
      _
    $region19: #{tpu_custom_call.1} parent=1 // pred_check_branch
      %53 = sbr.rel (0) target = $region21
    $region20: #{tpu_custom_call.1} parent=1 // pred_region
      %55 = dma.done [#allocation7], 512
    $region21: #{tpu_custom_call.1} parent=1 // pred_fallthru
      _
    // Predicated region
    $region22: #{tpu_custom_call.1} parent=1 // pred_check
      _
    $region23: #{tpu_custom_call.1} parent=1 // pred_check_branch
      %57 = sbr.rel (0) target = $region25
    $region24: #{tpu_custom_call.1} parent=1 // pred_region
      %59 = dma.done [#allocation7], 128
    $region25: #{tpu_custom_call.1} parent=1 // pred_fallthru
      _
    %p60 = scmp.eq.s32.totalorder 0, 0
    // Predicated region
    $region26: #{tpu_custom_call.1} parent=1 // pred_check
      %p61 = pneg %p60
    $region27: #{tpu_custom_call.1} parent=1 // pred_check_branch
      %63 = sbr.rel (%p61) target = $region29
    $region28: #{tpu_custom_call.1} parent=1 // pred_region
      %64 = vst [vmem:[#allocation2] sm:$0xff] 0.0
    $region29: #{tpu_custom_call.1} parent=1 // pred_fallthru
      _
    %v65 = vld [vmem:[#allocation3] sm:$0xff]
    %v66 = vld [vmem:[#allocation3 + $0x8] sm:$0xff]
    %v67 = vld [vmem:[#allocation3 + $0x10] sm:$0xff]
    %v68 = vld [vmem:[#allocation3 + $0x18] sm:$0xff]
    %v69 = vld [vmem:[#allocation6] sm:$0xff]
    %v70 = vld [vmem:[#allocation6 + $0x8] sm:$0xff]
    %v71 = vld [vmem:[#allocation6 + $0x10] sm:$0xff]
    %v72 = vld [vmem:[#allocation6 + $0x18] sm:$0xff]
    %v73 = vmul.f32 %v65, %v69
    %v74 = vmul.f32 %v66, %v70
    %v75 = vmul.f32 %v67, %v71
    %v76 = vmul.f32 %v68, %v72
    %v77 = vadd.f32 %v73, %v74
    %v78 = vadd.f32 %v77, %v75
    %v79 = vadd.f32 %v78, %v76
    %v80 = vrot.slane %v79, 4
    %v81 = vadd.f32 %v79, %v80
    %v82 = vrot.slane %v81, 2
    %v83 = vadd.f32 %v81, %v82
    %v84 = vrot.slane %v83, 1
    %v85 = vadd.f32 %v83, %v84
    %v86 = vld [vmem:[#allocation8] sm:$0x1]
    %v87 = vld [vmem:[#allocation8 + $0x1] sm:$0x1]
    %v88 = vld [vmem:[#allocation8 + $0x2] sm:$0x1]
    %v89 = vld [vmem:[#allocation8 + $0x3] sm:$0x1]
    %v90 = vsub.f32 %v85, %v86
    %v91 = vadd.f32 %v88, %v89
    %v92 = vmul.f32 %v87, %v90
    %v93 = vld [vmem:[#allocation2] sm:$0x1]
    %v94 = vmul.f32 %v92, %v90
    %v95 = vadd.f32 %v93, %v94
    %96 = vst [vmem:[#allocation2] sm:$0x1] %v95
    %v97 = vld [vmem:[#allocation2 + $0x1] sm:$0x1]
    %v98 = vadd.f32 %v97, %v92
    %99 = vst [vmem:[#allocation2 + $0x1] sm:$0x1] %v98
    %v100 = vld [vmem:[#allocation2 + $0x2] sm:$0x1]
    %v101 = vadd.f32 %v100, %v87
    %102 = vst [vmem:[#allocation2 + $0x2] sm:$0x1] %v101
    %v103 = vld [vmem:[#allocation2 + $0x3] sm:$0x1]
    %v104 = vadd.f32 %v103, %v91
    %105 = vst [vmem:[#allocation2 + $0x3] sm:$0x1] %v104
    %v106 = vld [vmem:[#allocation2 + $0x4] sm:$0x1]
    %v107 = vmul.f32 %v91, %v91
    %v108 = vadd.f32 %v106, %v107
    %109 = vst [vmem:[#allocation2 + $0x4] sm:$0x1] %v108
    // Predicated region
    $region30: #{tpu_custom_call.1} parent=1 // pred_check
      %p110 = pneg %p60
    $region31: #{tpu_custom_call.1} parent=1 // pred_check_branch
      %112 = sbr.rel (%p110) target = $region33
    $region32: #{tpu_custom_call.1} parent=1 // pred_region
      %v113 = vld [vmem:[#allocation2] sm:$0x1]
      %vm114 = vcmask 1040384
      %v115 = vsel %vm114, %v113, 0.0
      %116 = vadd.xlane.f32.xlu0 %v115
      %v117 = vpop.xlane.xlu0 %116
      %v118 = vld [vmem:[#allocation2 + $0x1] sm:$0x1]
      %v119 = vsel %vm114, %v118, 0.0
      %120 = vadd.xlane.f32.xlu0 %v119
      %v121 = vpop.xlane.xlu0 %120
      %v122 = vld [vmem:[#allocation2 + $0x2] sm:$0x1]
      %v123 = vsel %vm114, %v122, 0.0
      %124 = vadd.xlane.f32.xlu0 %v123
      %v125 = vpop.xlane.xlu0 %124
      %v126 = vld [vmem:[#allocation2 + $0x3] sm:$0x1]
      %v127 = vsel %vm114, %v126, 0.0
      %128 = vadd.xlane.f32.xlu0 %v127
      %v129 = vpop.xlane.xlu0 %128
      %v130 = vld [vmem:[#allocation2 + $0x4] sm:$0x1]
      %v131 = vsel %vm114, %v130, 0.0
      %132 = vadd.xlane.f32.xlu0 %v131
      %v133 = vpop.xlane.xlu0 %132
      %v134 = vmul.f32 %v117, 8.0
      %v135 = vmul.f32 %v129, 2.0
      %v136 = vmul.f32 %v135, %v121
      %v137 = vadd.f32 %v134, %v136
      %v138 = vmul.f32 %v133, %v125
      %v139 = vadd.f32 %v137, %v138
      %v140 = vmul.f32 %v139, 0.5
      %vm141 = vcmask 0
      %142 = vst.msk [vmem:[#allocation9] sm:$0x1] %vm141, %v140
    $region33: #{tpu_custom_call.1} parent=1 // pred_fallthru
      _
    // Predicated region
    $region34: #{tpu_custom_call.1} parent=1 // pred_check
      _
    $region35: #{tpu_custom_call.1} parent=1 // pred_check_branch
      %144 = sbr.rel (0) target = $region37
    $region36: #{tpu_custom_call.1} parent=1 // pred_region
      %146 = vsyncadd [#allocation5], 0
      %s148 = sshll.u32 [#allocation9], 4
      %s149 = int_to_ptr.vmem [resolvable:$true] %s148
      %s150 = sshll.u32 %s3, 4
      %s151 = int_to_ptr.hbm [resolvable:$true] %s150
      %153 = dma.vmem_to_hbm [thread:$0]  %s149, 16, %s151, [#allocation5]
    $region37: #{tpu_custom_call.1} parent=1 // pred_fallthru
      _
    // Predicated region
    $region38: #{tpu_custom_call.1} parent=1 // pred_check
      _
    $region39: #{tpu_custom_call.1} parent=1 // pred_check_branch
      %155 = sbr.rel (0) target = $region41
    $region40: #{tpu_custom_call.1} parent=1 // pred_region
      %157 = dma.done [#allocation5], 16
    $region41: #{tpu_custom_call.1} parent=1 // pred_fallthru
      _
    %158 = vsyncpa [#allocation4], 1
    %159 = vsyncpa [#allocation7], 1
    %160 = vsyncpa [#allocation5], 1

</llo_original>
